<compile_context>
chip_gen: v5e
topology: v5e:2x2
jax: 0.10.0
libtpu: 0.0.40
codegen_flags: <defaults>
</compile_context>

<pallas_src>
import jax
import jax.numpy as jnp
from jax import lax
from jax.experimental import pallas as pl
from jax.experimental.pallas import tpu as pltpu

LANE = 128
SUBLANE = 8


def _round_up(v, m):
    return ((v + m - 1) // m) * m


# --------------------------------------------------------------------------- #
# Kernel: one fused matmul per T tile, transposed (lane-dense) outputs.
# --------------------------------------------------------------------------- #
def _lowrnorm_tile_kernel(x_ref, wc_ref, bc_ref, hidden_ref, out_ref):
    """x_ref: [tile_t, I]; wc_ref: [H_pad+O, I]; bc_ref: [H_pad+O, 1] (f32).

    Writes hidden^T [H, tile_t] and out^T [O, tile_t].
    """
    # comb^T = Wc @ x^T  -> [H_pad + O, tile_t]; contraction on the minor dims
    # of both operands (no in-kernel transposes / relayouts).
    comb = lax.dot_general(
        wc_ref[...], x_ref[...],
        dimension_numbers=(((1,), (1,)), ((), ())),
        preferred_element_type=jnp.float32,
    )
    comb = comb + bc_ref[...]                       # broadcast [H_pad+O, 1]

    h = hidden_ref.shape[0]                         # H
    h_pad = wc_ref.shape[0] - out_ref.shape[0]      # H rounded up to sublane(8)
    hidden_ref[...] = comb[:h, :].astype(hidden_ref.dtype)
    out_ref[...] = comb[h_pad:, :].astype(out_ref.dtype)


# --------------------------------------------------------------------------- #
# Wrapper
# --------------------------------------------------------------------------- #
def lowrnorm_forward(x, w1, b1, w2, b2, *, tile_t=None):
    """x: [T, I]; w1: [H, I]; b1: [H]; w2: [O, H]; b2: [O].

    Returns (hidden [T, H], output [T, O]) in x.dtype.
    """
    T, I = x.shape
    H = w1.shape[0]
    O = w2.shape[0]

    compute_dtype = x.dtype
    out_dtype = x.dtype
    h_pad = _round_up(H, SUBLANE)

    # ---- Tiny weight prep in plain XLA (Sphere norm + fc1/fc2 fusion). ----
    w1f = w1.astype(jnp.float32)
    w2f = w2.astype(jnp.float32)
    b1f = b1.astype(jnp.float32)
    b2f = b2.astype(jnp.float32)
    # Sphere(dim=0): normalize each column of W2 (matches PyTorch; no epsilon).
    w2n = w2f / jnp.linalg.norm(w2f, axis=0, keepdims=True)
    # Fused weight/bias: rows [:H] produce hidden, rows [h_pad:] produce output.
    wc = jnp.zeros((h_pad + O, I), jnp.float32)
    wc = wc.at[:H].set(w1f).at[h_pad:].set(w2n @ w1f)
    bc = jnp.zeros((h_pad + O,), jnp.float32)
    bc = bc.at[:H].set(b1f).at[h_pad:].set(w2n @ b1f + b2f)
    wc = wc.astype(compute_dtype)                   # bf16-friendly MXU operand
    bc_col = bc.reshape(h_pad + O, 1)               # f32, added post-accumulate

    # ---- Tile size from lane/sublane-PADDED per-row VMEM footprint. ----
    x_item = jnp.dtype(compute_dtype).itemsize
    o_item = jnp.dtype(out_dtype).itemsize
    bytes_per_t = (_round_up(I, LANE) * x_item        # one x row (lane-padded)
                   + _round_up(H, SUBLANE) * o_item   # one hidden^T column
                   + _round_up(O, SUBLANE) * o_item)  # one out^T column
    if tile_t is None:
        budget = 12 * 1024 * 1024                     # streams incl. 2x buffers
        tile_t = budget // (2 * bytes_per_t)
        tile_t = min(tile_t, 8192)
        # Keep >=2 grid steps when possible so v7x megacore has work to shard.
        tile_t = min(tile_t, _round_up(pl.cdiv(T, 2), LANE))
    tile_t = max(LANE, _round_up(tile_t, LANE))       # lane-dense output blocks

    n_tiles = pl.cdiv(T, tile_t)                      # ragged T: partial last
                                                      # block is masked by Pallas

    resident = lambda i: (0, 0)                       # grid-invariant blocks

    grid_spec = pltpu.PrefetchScalarGridSpec(
        num_scalar_prefetch=0,
        grid=(n_tiles,),
        in_specs=[
            pl.BlockSpec((tile_t, I), lambda i: (i, 0)),     # x: streamed over T
            pl.BlockSpec((h_pad + O, I), resident),          # fused weights
            pl.BlockSpec((h_pad + O, 1), resident),          # fused bias column
        ],
        out_specs=(
            pl.BlockSpec((H, tile_t), lambda i: (0, i)),     # hidden^T tile
            pl.BlockSpec((O, tile_t), lambda i: (0, i)),     # out^T tile
        ),
    )

    hidden_t, out_t = pl.pallas_call(
        _lowrnorm_tile_kernel,
        out_shape=(
            jax.ShapeDtypeStruct((H, T), out_dtype),
            jax.ShapeDtypeStruct((O, T), out_dtype),
        ),
        grid_spec=grid_spec,
        compiler_params=pltpu.CompilerParams(
            dimension_semantics=("parallel",),               # megacore-shardable
            vmem_limit_bytes=32 * 1024 * 1024,               # explicit budget
        ),
    )(x, wc, bc_col)

    # Consume-transposed if the caller can; here we return module layout.
    return hidden_t.T, out_t.T


# --------------------------------------------------------------------------- #
# Pure-JAX reference (matches the PyTorch module's forward)
# --------------------------------------------------------------------------- #
def lowrnorm_reference(x, w1, b1, w2, b2):
    hidden = x @ w1.T + b1[None, :]
    w2n = w2 / jnp.linalg.norm(w2, axis=0, keepdims=True)
    out = hidden @ w2n.T + b2[None, :]
    return hidden, out


if __name__ == "__main__":
    # Small shapes consistent with the module's forward contract; n_time is a
    # non-multiple of the tile so the multi-step grid + masked tail path runs.
    n_time, input_size, hidden_size = 200, 16, 4
    output_size = input_size  # so the fc1.bias = -U_init @ b_init branch applies

    key = jax.random.PRNGKey(0)
    k_x, k_u, k_b, k_w2 = jax.random.split(key, 4)

    x = jax.random.normal(k_x, (n_time, input_size), dtype=jnp.float32)

    # Deterministic synthetic "U_init" / "b_init".
    U_init = jax.random.normal(k_u, (hidden_size, input_size), dtype=jnp.float32) * 0.1
    b_init = jax.random.normal(k_b, (output_size,), dtype=jnp.float32) * 0.1

    w1 = U_init                        # fc1.weight
    b1 = -U_init @ b_init              # fc1.bias (input_size == output_size branch)
    w2 = jax.random.normal(k_w2, (output_size, hidden_size), dtype=jnp.float32)
    b2 = b_init                        # fc2.bias

    hidden, out = lowrnorm_forward(x, w1, b1, w2, b2)
    jax.block_until_ready((hidden, out))

    h_ref, o_ref = lowrnorm_reference(x, w1, b1, w2, b2)
    assert hidden.shape == (n_time, hidden_size)
    assert out.shape == (n_time, output_size)
    # Output differs from the reference only by f32 reassociation (fc1+fc2 fused
    # into a single matmul), so a tolerance-based check is used.
    assert jnp.allclose(hidden, h_ref, atol=2e-4, rtol=2e-4)
    assert jnp.allclose(out, o_ref, atol=2e-4, rtol=2e-4)

    print("KERNEL_OK")
</pallas_src>

<mosaic_0001>
module attributes {stable_mosaic.version = 11 : i64} {
  func.func @_lowrnorm_tile_kernel(%arg0: i32, %arg1: memref<128x16xf32, #tpu.memory_space<vmem>>, %arg2: memref<24x16xf32, #tpu.memory_space<vmem>>, %arg3: memref<24x1xf32, #tpu.memory_space<vmem>>, %arg4: memref<4x128xf32, #tpu.memory_space<vmem>>, %arg5: memref<16x128xf32, #tpu.memory_space<vmem>>) attributes {dimension_semantics = [#tpu.dimension_semantics<parallel>], iteration_bounds = array<i64: 2>, scalar_prefetch = 0 : i64, scratch_operands = 0 : i64, tpu.core_type = #tpu.core_type<tc>, window_params = [{transform_indices = @transform_0, window_bounds = array<i64: 128, 16>}, {pipeline_mode = #tpu.pipeline_mode<synchronous>, transform_indices = @transform_1, window_bounds = array<i64: 24, 16>}, {pipeline_mode = #tpu.pipeline_mode<synchronous>, transform_indices = @transform_2, window_bounds = array<i64: 24, 1>}, {transform_indices = @transform_3, window_bounds = array<i64: 4, 128>}, {transform_indices = @transform_4, window_bounds = array<i64: 16, 128>}]} {
    %c0 = arith.constant 0 : index
    %c0_0 = arith.constant 0 : index
    %0 = vector.load %arg2[%c0, %c0_0] : memref<24x16xf32, #tpu.memory_space<vmem>>, vector<24x16xf32>
    %c0_1 = arith.constant 0 : index
    %c0_2 = arith.constant 0 : index
    %1 = vector.load %arg1[%c0_1, %c0_2] : memref<128x16xf32, #tpu.memory_space<vmem>>, vector<128x16xf32>
    %cst = arith.constant dense<0.000000e+00> : vector<24x128xf32>
    %2 = tpu.matmul %0, %1, %cst {dimension_numbers = #tpu.dot_dimension_numbers<[1], [1], [0], [0], [0, 0, 1, 0], [], []>} : vector<24x16xf32>, vector<128x16xf32>, vector<24x128xf32> -> vector<24x128xf32>
    %c0_3 = arith.constant 0 : index
    %c0_4 = arith.constant 0 : index
    %3 = vector.load %arg3[%c0_3, %c0_4] : memref<24x1xf32, #tpu.memory_space<vmem>>, vector<24x1xf32>
    %4 = vector.broadcast %3 : vector<24x1xf32> to vector<24x128xf32>
    %5 = arith.addf %2, %4 : vector<24x128xf32>
    %6 = vector.extract_strided_slice %5 {offsets = [0, 0], sizes = [4, 128], strides = [1, 1]} : vector<24x128xf32> to vector<4x128xf32>
    %c0_5 = arith.constant 0 : index
    %c0_6 = arith.constant 0 : index
    %7 = vector.load %arg4[%c0_5, %c0_6] : memref<4x128xf32, #tpu.memory_space<vmem>>, vector<4x128xf32>
    tpu.vector_store %arg4[%c0_5, %c0_6], %6 {strides = array<i32>} : memref<4x128xf32, #tpu.memory_space<vmem>>, vector<4x128xf32>,
    %8 = vector.extract_strided_slice %5 {offsets = [8, 0], sizes = [16, 128], strides = [1, 1]} : vector<24x128xf32> to vector<16x128xf32>
    %c0_7 = arith.constant 0 : index
    %c0_8 = arith.constant 0 : index
    %9 = vector.load %arg5[%c0_7, %c0_8] : memref<16x128xf32, #tpu.memory_space<vmem>>, vector<16x128xf32>
    tpu.vector_store %arg5[%c0_7, %c0_8], %8 {strides = array<i32>} : memref<16x128xf32, #tpu.memory_space<vmem>>, vector<16x128xf32>,
    return
  }
  func.func @transform_0(%arg0: i32) -> (i32, i32) {
    %c0_i32 = arith.constant 0 : i32
    %c0_i32_0 = arith.constant 0 : i32
    return %arg0, %c0_i32 : i32, i32
  }
  func.func @transform_1(%arg0: i32) -> (i32, i32) {
    %c0_i32 = arith.constant 0 : i32
    %c0_i32_0 = arith.constant 0 : i32
    %c0_i32_1 = arith.constant 0 : i32
    return %c0_i32, %c0_i32_0 : i32, i32
  }
  func.func @transform_2(%arg0: i32) -> (i32, i32) {
    %c0_i32 = arith.constant 0 : i32
    %c0_i32_0 = arith.constant 0 : i32
    %c0_i32_1 = arith.constant 0 : i32
    return %c0_i32, %c0_i32_0 : i32, i32
  }
  func.func @transform_3(%arg0: i32) -> (i32, i32) {
    %c0_i32 = arith.constant 0 : i32
    %c0_i32_0 = arith.constant 0 : i32
    return %c0_i32, %arg0 : i32, i32
  }
  func.func @transform_4(%arg0: i32) -> (i32, i32) {
    %c0_i32 = arith.constant 0 : i32
    %c0_i32_0 = arith.constant 0 : i32
    return %c0_i32, %arg0 : i32, i32
  }
}

</mosaic_0001>

<llo_original>
// kernel: tpu_custom_call.1
$region0: #{tpu_custom_call.1}
  #allocation0 [shape = 'u32[]', space=smem, size = 0x4, offset = 0x4, fixed_abs, tag = 'smem constant byte address 0x4 - core index']
  #allocation1 [shape = 'u32[72,128]{1,0:T(1,128)}', space=vmem, size = 0x9000, scoped, tag = 'internal scratch']
  %s0 = inlined_call_operand.vmem [shape: f32[200,16], index: 0, kind: input, shape index: {}]
  %s1 = inlined_call_operand.vmem [shape: f32[24,16], index: 1, kind: input, shape index: {}]
  %s2 = inlined_call_operand.vmem [shape: f32[24,1], index: 2, kind: input, shape index: {}]
  %s3 = inlined_call_operand.hbm [shape: f32[4,200], index: 3, kind: output, shape index: {0}]
  %s4 = inlined_call_operand.hbm [shape: f32[16,200], index: 4, kind: output, shape index: {1}]
  %5 = xla_tuple %s3, %s4
  %s6 = sld [smem:[#allocation0]]
  $region53: #{tpu_custom_call.1} parent=0
    _
  %s8 = ssub.s32 1, %s6
  %s9 = scalar_select 0, %s8, %s6
  $region1: #{tpu_custom_call.1} parent=0
    #allocation2 [shape = 'u8[4096]{0}', space=vmem, size = 0x1000, scoped, tag = 'output window, operand 0']
    #allocation3 [shape = 's32[2]{0}', space=sflag, size = 0x8, scoped, tag = 'scoped memory for tpu_custom_call.1']
    #allocation4 [shape = 'u8[16384]{0}', space=vmem, size = 0x4000, scoped, tag = 'output window, operand 1']
    #allocation5 [shape = 's32[2]{0}', space=sflag, size = 0x8, scoped, tag = 'scoped memory for tpu_custom_call.1']
    %10 = vsyncpa [#allocation3], 0
    %s11 = scalar_lea.sflag [#allocation3], 1
    %12 = vsyncpa %s11, 0
    %13 = vsyncpa [#allocation5], 0
    %s14 = scalar_lea.sflag [#allocation5], 1
    %15 = vsyncpa %s14, 0
    loop: start=0, step=1, limit=4
    $region2: #{tpu_custom_call.1} parent=1 // loop_pre_header
      _
    $region3: #{tpu_custom_call.1} parent=1 // loop_header
      %s17 = sphi 0, %s21
      %p18 = scmp.ge.s32.totalorder %s17, 4
      %s27 = sphi 0, %s29
      %s30 = sphi 0, %s27
      %s31 = sphi 0, %s30
      %s47 = sphi 0, %s31
      %s51 = sphi 0, %s51
      %s53 = sphi 0, %s51
      %s54 = sphi 0, %s53
      %s68 = sphi 0, %s54
      %s72 = sphi 0, %s72
      %s74 = sphi 0, %s72
      %s75 = sphi 0, %s74
      %s89 = sphi 0, %s75
      %s95 = sphi 0, %s97
      %s98 = sphi 0, %s95
      %s99 = sphi 0, %s98
      %s115 = sphi 0, %s99
      %s121 = sphi 0, %s123
      %s124 = sphi 0, %s121
      %s125 = sphi 0, %s124
      %s141 = sphi 0, %s125
    $region4: #{tpu_custom_call.1} parent=1 // loop_header_branch
      %20 = sbr.rel (%p18) target = $region8
    $region5: #{tpu_custom_call.1} parent=1 // loop_body
      %s22 = ssub.s32 %s17, 1
      %s23 = ssub.s32 %s17, 2
      %s24 = sadd.s32 %s17, 1
      %s25 = ssub.s32 %s17, %s24
      %p26 = scmp.eq.s32.totalorder %s25, 0
      %s28 = sadd.s32 %s27, 1
      %s29 = scalar_select %p26, %s27, %s28
      %p32 = pneg %p26
      %p33 = scmp.eq.s32.totalorder %s17, 1
      %p34 = por %p32, %p33
      %p35 = scmp.ne.s32.totalorder %s27, %s30
      %p36 = scmp.eq.s32.totalorder %s17, 0
      %p37 = por %p35, %p36
      %p38 = scmp.ne.s32.totalorder %s27, %s30
      %p39 = scmp.eq.s32.totalorder %s22, 1
      %p40 = por %p38, %p39
      %p41 = scmp.ne.s32.totalorder %s30, %s31
      %p42 = scmp.eq.s32.totalorder %s22, 0
      %p43 = por %p41, %p42
      %p44 = scmp.ne.s32.totalorder %s30, %s31
      %p45 = scmp.eq.s32.totalorder %s23, 1
      %p46 = por %p44, %p45
      %p48 = scmp.ne.s32.totalorder %s31, %s47
      %p49 = scmp.eq.s32.totalorder %s23, 0
      %p50 = por %p48, %p49
      %s52 = sadd.s32 %s51, 1
      %p55 = scmp.eq.s32.totalorder %s17, 1
      %p56 = scmp.ne.s32.totalorder %s51, %s53
      %p57 = scmp.eq.s32.totalorder %s17, 0
      %p58 = por %p56, %p57
      %p59 = scmp.ne.s32.totalorder %s51, %s53
      %p60 = scmp.eq.s32.totalorder %s22, 1
      %p61 = por %p59, %p60
      %p62 = scmp.ne.s32.totalorder %s53, %s54
      %p63 = scmp.eq.s32.totalorder %s22, 0
      %p64 = por %p62, %p63
      %p65 = scmp.ne.s32.totalorder %s53, %s54
      %p66 = scmp.eq.s32.totalorder %s23, 1
      %p67 = por %p65, %p66
      %p69 = scmp.ne.s32.totalorder %s54, %s68
      %p70 = scmp.eq.s32.totalorder %s23, 0
      %p71 = por %p69, %p70
      %s73 = sadd.s32 %s72, 1
      %p76 = scmp.eq.s32.totalorder %s17, 1
      %p77 = scmp.ne.s32.totalorder %s72, %s74
      %p78 = scmp.eq.s32.totalorder %s17, 0
      %p79 = por %p77, %p78
      %p80 = scmp.ne.s32.totalorder %s72, %s74
      %p81 = scmp.eq.s32.totalorder %s22, 1
      %p82 = por %p80, %p81
      %p83 = scmp.ne.s32.totalorder %s74, %s75
      %p84 = scmp.eq.s32.totalorder %s22, 0
      %p85 = por %p83, %p84
      %p86 = scmp.ne.s32.totalorder %s74, %s75
      %p87 = scmp.eq.s32.totalorder %s23, 1
      %p88 = por %p86, %p87
      %p90 = scmp.ne.s32.totalorder %s75, %s89
      %p91 = scmp.eq.s32.totalorder %s23, 0
      %p92 = por %p90, %p91
      %s93 = ssub.s32 %s17, %s24
      %p94 = scmp.eq.s32.totalorder %s93, 0
      %s96 = sadd.s32 %s95, 1
      %s97 = scalar_select %p94, %s95, %s96
      %p100 = pneg %p94
      %p101 = scmp.eq.s32.totalorder %s17, 1
      %p102 = por %p100, %p101
      %p103 = scmp.ne.s32.totalorder %s95, %s98
      %p104 = scmp.eq.s32.totalorder %s17, 0
      %p105 = por %p103, %p104
      %p106 = scmp.ne.s32.totalorder %s95, %s98
      %p107 = scmp.eq.s32.totalorder %s22, 1
      %p108 = por %p106, %p107
      %p109 = scmp.ne.s32.totalorder %s98, %s99
      %p110 = scmp.eq.s32.totalorder %s22, 0
      %p111 = por %p109, %p110
      %p112 = scmp.ne.s32.totalorder %s98, %s99
      %p113 = scmp.eq.s32.totalorder %s23, 1
      %p114 = por %p112, %p113
      %p116 = scmp.ne.s32.totalorder %s99, %s115
      %p117 = scmp.eq.s32.totalorder %s23, 0
      %p118 = por %p116, %p117
      %s119 = ssub.s32 %s17, %s24
      %p120 = scmp.eq.s32.totalorder %s119, 0
      %s122 = sadd.s32 %s121, 1
      %s123 = scalar_select %p120, %s121, %s122
      %p126 = pneg %p120
      %p127 = scmp.eq.s32.totalorder %s17, 1
      %p128 = por %p126, %p127
      %p129 = scmp.ne.s32.totalorder %s121, %s124
      %p130 = scmp.eq.s32.totalorder %s17, 0
      %p131 = por %p129, %p130
      %p132 = scmp.ne.s32.totalorder %s121, %s124
      %p133 = scmp.eq.s32.totalorder %s22, 1
      %p134 = por %p132, %p133
      %p135 = scmp.ne.s32.totalorder %s124, %s125
      %p136 = scmp.eq.s32.totalorder %s22, 0
      %p137 = por %p135, %p136
      %p138 = scmp.ne.s32.totalorder %s124, %s125
      %p139 = scmp.eq.s32.totalorder %s23, 1
      %p140 = por %p138, %p139
      %p142 = scmp.ne.s32.totalorder %s125, %s141
      %p143 = scmp.eq.s32.totalorder %s23, 0
      %p144 = por %p142, %p143
      %p145 = scmp.le.s32.totalorder 1, %s17
      %p146 = scmp.lt.s32.totalorder %s17, 3
      %p147 = pnand %p145, %p146
      %p148 = pneg %p147
      // Predicated region
      $region9: #{tpu_custom_call.1} parent=5 // pred_check
        _
      $region10: #{tpu_custom_call.1} parent=5 // pred_check_branch
        %150 = sbr.rel (%p147) target = $region12
      $region11: #{tpu_custom_call.1} parent=5 // pred_region
        %s151 = ssub.s32 %s17, 1
        // Predicated region
        $region13: #{tpu_custom_call.1} parent=11 // pred_check
          %p152 = pneg %p64
        $region14: #{tpu_custom_call.1} parent=11 // pred_check_branch
          %154 = sbr.rel (%p152) target = $region16
        $region15: #{tpu_custom_call.1} parent=11 // pred_region
          _
        $region16: #{tpu_custom_call.1} parent=11 // pred_fallthru
          _
        // Predicated region
        $region17: #{tpu_custom_call.1} parent=11 // pred_check
          %p155 = pneg %p85
        $region18: #{tpu_custom_call.1} parent=11 // pred_check_branch
          %157 = sbr.rel (%p155) target = $region20
        $region19: #{tpu_custom_call.1} parent=11 // pred_region
          _
        $region20: #{tpu_custom_call.1} parent=11 // pred_fallthru
          _
      $region12: #{tpu_custom_call.1} parent=5 // pred_fallthru
        _
      %p158 = scmp.lt.s32.totalorder %s17, 2
      // Predicated region
      $region21: #{tpu_custom_call.1} parent=5 // pred_check
        %p159 = pneg %p158
      $region22: #{tpu_custom_call.1} parent=5 // pred_check_branch
        %161 = sbr.rel (%p159) target = $region24
      $region23: #{tpu_custom_call.1} parent=5 // pred_region
        // Predicated region
        $region25: #{tpu_custom_call.1} parent=23 // pred_check
          %p162 = pneg %p37
        $region26: #{tpu_custom_call.1} parent=23 // pred_check_branch
          %164 = sbr.rel (%p162) target = $region28
        $region27: #{tpu_custom_call.1} parent=23 // pred_region
          %s165 = smul.u32 16, %s17
          %s166 = ssub.s32 25, %s165
          %p167 = scmp.lt.s32.totalorder %s166, 16
          %s168 = scalar_select %p167, %s166, 16
          %s169 = smul.u32 8, %s168
          %p170 = scmp.lt.s32.totalorder %s165, 24
          %s171 = scalar_select %p170, %s165, 24
          %s172 = smul.addr %s171, 8
          %s173 = scalar_lea.vmem %s0, %s172
          %s174 = smul.u32 16, %s17
          %s175 = ssub.s32 25, %s174
          %p176 = scmp.lt.s32.totalorder %s175, 16
          %s177 = scalar_select %p176, %s175, 16
          %s178 = smul.u32 8, %s177
        $region28: #{tpu_custom_call.1} parent=23 // pred_fallthru
          _
      $region24: #{tpu_custom_call.1} parent=5 // pred_fallthru
        _
      %p179 = scmp.le.s32.totalorder 1, %s17
      %p180 = scmp.lt.s32.totalorder %s17, 3
      %p181 = pnand %p179, %p180
      %p182 = pneg %p181
      // Predicated region
      $region29: #{tpu_custom_call.1} parent=5 // pred_check
        _
      $region30: #{tpu_custom_call.1} parent=5 // pred_check_branch
        %184 = sbr.rel (%p181) target = $region32
      $region31: #{tpu_custom_call.1} parent=5 // pred_region
        %s185 = ssub.s32 %s17, 1
        %s186 = smul.u32 16, %s22
        %s187 = ssub.s32 25, %s186
        %p188 = scmp.lt.s32.totalorder %s187, 16
        %s189 = scalar_select %p188, %s187, 16
        %s190 = smul.u32 8, %s189
        %p191 = scmp.lt.s32.totalorder %s186, 24
        %s192 = scalar_select %p191, %s186, 24
        %s193 = smul.addr %s192, 8
        %s194 = scalar_lea.vmem %s0, %s193
        %p195 = pneg %p43
        %p196 = pneg %p40
        %p197 = pneg %p64
        %p198 = pneg %p61
        %p199 = pneg %p85
        %p200 = pneg %p82
        %p201 = pneg %p111
        %p202 = pneg %p108
        %s203 = sand.u32 %s98, 1
        %s204 = scalar_lea.sflag [#allocation3], %s203
        %s205 = sand.u32 %s98, 1
        %s206 = smul.addr %s205, 4
        %s207 = scalar_lea.vmem [#allocation2], %s206
        %p208 = pneg %p137
        %p209 = pneg %p134
        %s210 = sand.u32 %s124, 1
        %s211 = scalar_lea.sflag [#allocation5], %s210
        %s212 = sand.u32 %s124, 1
        %s213 = smul.addr %s212, 16
        %s214 = scalar_lea.vmem [#allocation4], %s213
        %s215 = smul.u32 16, %s22
        %s216 = ssub.s32 25, %s215
        %p217 = scmp.lt.s32.totalorder %s216, 16
        %s218 = scalar_select %p217, %s216, 16
        %s219 = smul.u32 8, %s218
        %p220 = scmp.lt.s32.totalorder %s215, 24
        %s221 = scalar_select %p220, %s215, 24
        %s222 = smul.addr %s221, 8
        %s223 = scalar_lea.vmem %s0, %s222
        %s224 = smul.u32 16, %s22
        %s225 = ssub.s32 25, %s224
        %p226 = scmp.lt.s32.totalorder %s225, 16
        %s227 = scalar_select %p226, %s225, 16
        %s228 = smul.u32 8, %s227
        %v229 = vld [vmem:[%s1] sm:$0xff]
        %v230 = vld [vmem:[%s1 + $0x8] sm:$0xff]
        %v231 = vld [vmem:[%s1 + $0x10] sm:$0xff]
        %v232 = vld [vmem:[%s223] sm:$0xff]
        %v233 = vld [vmem:[%s223 + $0x8] sm:$0xff]
        %v234 = vld [vmem:[%s223 + $0x10] sm:$0xff]
        %v235 = vld [vmem:[%s223 + $0x18] sm:$0xff]
        %v236 = vld [vmem:[%s223 + $0x20] sm:$0xff]
        %v237 = vld [vmem:[%s223 + $0x28] sm:$0xff]
        %v238 = vld [vmem:[%s223 + $0x30] sm:$0xff]
        %v239 = vld [vmem:[%s223 + $0x38] sm:$0xff]
        %v240 = vld [vmem:[%s223 + $0x40] sm:$0xff]
        %v241 = vld [vmem:[%s223 + $0x48] sm:$0xff]
        %v242 = vld [vmem:[%s223 + $0x50] sm:$0xff]
        %v243 = vld [vmem:[%s223 + $0x58] sm:$0xff]
        %v244 = vld [vmem:[%s223 + $0x60] sm:$0xff]
        %v245 = vld [vmem:[%s223 + $0x68] sm:$0xff]
        %v246 = vld [vmem:[%s223 + $0x70] sm:$0xff]
        %v247 = vld [vmem:[%s223 + $0x78] sm:$0xff]
        %v248 = vld [vmem:[%s2] sm:$0xff]
        %v249 = vld [vmem:[%s2 + $0x8] sm:$0xff]
        %v250 = vld [vmem:[%s2 + $0x10] sm:$0xff]
        %252 = vset.pattern.permute.xlu0 0
        %253 = vperm.xlu0 %252, %v248
        %v254 = vpop.permute.xlu0 %253
        %257 = vset.pattern.permute.xlu0 0
        %258 = vperm.xlu0 %257, %v249
        %v259 = vpop.permute.xlu0 %258
        %262 = vset.pattern.permute.xlu0 0
        %263 = vperm.xlu0 %262, %v250
        %v264 = vpop.permute.xlu0 %263
        %vm266 = vcmask 130048
        %v268 = vsel %vm266, %v229, 0
        %v271 = vsel %vm266, %v230, 0
        %v274 = vsel %vm266, %v231, 0
        %v277 = vsel %vm266, %v232, 0
        %v280 = vsel %vm266, %v233, 0
        %v283 = vsel %vm266, %v234, 0
        %v286 = vsel %vm266, %v235, 0
        %v289 = vsel %vm266, %v236, 0
        %v292 = vsel %vm266, %v237, 0
        %v295 = vsel %vm266, %v238, 0
        %v298 = vsel %vm266, %v239, 0
        %v301 = vsel %vm266, %v240, 0
        %v304 = vsel %vm266, %v241, 0
        %v307 = vsel %vm266, %v242, 0
        %v310 = vsel %vm266, %v243, 0
        %v313 = vsel %vm266, %v244, 0
        %v316 = vsel %vm266, %v245, 0
        %v319 = vsel %vm266, %v246, 0
        %v322 = vsel %vm266, %v247, 0
        %324 = vmatpush.xpose.msra.mxu0 %v322
        %325 = vmatpush.xpose.msra.mxu0 %v319
        %326 = vmatpush.xpose.msra.mxu0 %v316
        %327 = vmatpush.xpose.msra.mxu0 %v313
        %328 = vmatpush.xpose.msra.mxu0 %v310
        %329 = vmatpush.xpose.msra.mxu0 %v307
        %330 = vmatpush.xpose.msra.mxu0 %v304
        %331 = vmatpush.xpose.msra.mxu0 %v301
        %332 = vmatpush.xpose.msra.mxu0 %v298
        %333 = vmatpush.xpose.msra.mxu0 %v295
        %334 = vmatpush.xpose.msra.mxu0 %v292
        %335 = vmatpush.xpose.msra.mxu0 %v289
        %336 = vmatpush.xpose.msra.mxu0 %v286
        %337 = vmatpush.xpose.msra.mxu0 %v283
        %338 = vmatpush.xpose.msra.mxu0 %v280
        %339 = vmatpush.xpose.msra.mxu0 %v277
        %340 = vmatmul.f32.gmra.mxu0 %v268
        %v341 = vpop.f32.mrf.mxu0
        %v342 = vadd.f32 %v254, %v341
        %343 = vmatmul.f32.gmra.mxu0 %v271
        %v344 = vpop.f32.mrf.mxu0
        %v345 = vadd.f32 %v259, %v344
        %346 = vmatmul.f32.gmra.mxu0 %v274
        %v347 = vpop.f32.mrf.mxu0
        %v348 = vadd.f32 %v264, %v347
        %349 = vdwg.mxu0
        %350 = vst [vmem:[%s207] sm:$0xf] %v342
        %351 = vst [vmem:[%s214] sm:$0xff] %v345
        %352 = vst [vmem:[%s214 + $0x8] sm:$0xff] %v348
        %s353 = sand.u32 %s98, 1
        %s354 = scalar_lea.sflag [#allocation3], %s353
        %s355 = sand.u32 %s98, 1
        %s356 = smul.addr %s355, 4
        %s357 = scalar_lea.vmem [#allocation2], %s356
        %s358 = sand.u32 %s124, 1
        %s359 = scalar_lea.sflag [#allocation5], %s358
        %s360 = sand.u32 %s124, 1
        %s361 = smul.addr %s360, 16
        %s362 = scalar_lea.vmem [#allocation4], %s361
        // Predicated region
        $region33: #{tpu_custom_call.1} parent=31 // pred_check
          %p363 = pneg %p108
        $region34: #{tpu_custom_call.1} parent=31 // pred_check_branch
          %365 = sbr.rel (%p363) target = $region36
        $region35: #{tpu_custom_call.1} parent=31 // pred_region
          %367 = vsyncadd %s354, 0
          %s368 = smul.addr %s22, 4
          %s369 = scalar_lea.hbm %s3, %s368
          %s371 = sshll.u32 %s357, 4
          %s372 = int_to_ptr.vmem [resolvable:$true] %s371
          %s373 = sshll.u32 %s369, 4
          %s374 = int_to_ptr.hbm [resolvable:$true] %s373
          %376 = dma.vmem_to_hbm [thread:$0]  %s372, 64, %s374, %s354
        $region36: #{tpu_custom_call.1} parent=31 // pred_fallthru
          _
        // Predicated region
        $region37: #{tpu_custom_call.1} parent=31 // pred_check
          %p377 = pneg %p134
        $region38: #{tpu_custom_call.1} parent=31 // pred_check_branch
          %379 = sbr.rel (%p377) target = $region40
        $region39: #{tpu_custom_call.1} parent=31 // pred_region
          %381 = vsyncadd %s359, 0
          %s382 = smul.addr %s22, 8
          %s383 = scalar_lea.hbm %s4, %s382
          %s384 = sshll.u32 %s362, 4
          %s385 = int_to_ptr.vmem [resolvable:$true] %s384
          %s386 = sshll.u32 %s383, 4
          %s387 = int_to_ptr.hbm [resolvable:$true] %s386
          %392 = dma.vmem_to_hbm [thread:$0]  %s385, 256, %s387, %s359, 128, 256, 8
        $region40: #{tpu_custom_call.1} parent=31 // pred_fallthru
          _
      $region32: #{tpu_custom_call.1} parent=5 // pred_fallthru
        _
      %p393 = scmp.le.s32.totalorder 2, %s17
      // Predicated region
      $region41: #{tpu_custom_call.1} parent=5 // pred_check
        %p394 = pneg %p393
      $region42: #{tpu_custom_call.1} parent=5 // pred_check_branch
        %396 = sbr.rel (%p394) target = $region44
      $region43: #{tpu_custom_call.1} parent=5 // pred_region
        %s397 = ssub.s32 %s17, 2
        // Predicated region
        $region45: #{tpu_custom_call.1} parent=43 // pred_check
          %p398 = pneg %p114
        $region46: #{tpu_custom_call.1} parent=43 // pred_check_branch
          %400 = sbr.rel (%p398) target = $region48
        $region47: #{tpu_custom_call.1} parent=43 // pred_region
          %s401 = sand.u32 %s99, 1
          %s402 = scalar_lea.sflag [#allocation3], %s401
          %s403 = sand.u32 %s99, 1
          %s404 = smul.addr %s403, 4
          %s405 = scalar_lea.vmem [#allocation2], %s404
          %407 = dma.done %s402, 64
        $region48: #{tpu_custom_call.1} parent=43 // pred_fallthru
          _
        // Predicated region
        $region49: #{tpu_custom_call.1} parent=43 // pred_check
          %p408 = pneg %p140
        $region50: #{tpu_custom_call.1} parent=43 // pred_check_branch
          %410 = sbr.rel (%p408) target = $region52
        $region51: #{tpu_custom_call.1} parent=43 // pred_region
          %s411 = sand.u32 %s125, 1
          %s412 = scalar_lea.sflag [#allocation5], %s411
          %s413 = sand.u32 %s125, 1
          %s414 = smul.addr %s413, 16
          %s415 = scalar_lea.vmem [#allocation4], %s414
          %417 = dma.done %s412, 256
        $region52: #{tpu_custom_call.1} parent=43 // pred_fallthru
          _
      $region44: #{tpu_custom_call.1} parent=5 // pred_fallthru
        _
    $region6: #{tpu_custom_call.1} parent=1 // loop_footer
      %s21 = sadd.s32 1, %s17
    $region7: #{tpu_custom_call.1} parent=1 // loop_footer_branch
      %16 = sbr.rel target = $region3
    $region8: #{tpu_custom_call.1} parent=1 // loop_exit
      _
    %418 = vsyncpa [#allocation3], 1
    %s419 = scalar_lea.sflag [#allocation3], 1
    %420 = vsyncpa %s419, 1
    %421 = vsyncpa [#allocation5], 1
    %s422 = scalar_lea.sflag [#allocation5], 1
    %423 = vsyncpa %s422, 1

</llo_original>
